<compile_context>
chip_gen: v5e
topology: v5e:2x2
jax: 0.10.0
libtpu: 0.0.40
codegen_flags: <defaults>
</compile_context>

<pallas_src>
import functools

import jax
import jax.numpy as jnp
from jax.experimental import pallas as pl
from jax.experimental.pallas import tpu as pltpu

LANE = 128
_TARGET_BLOCK_BYTES = 512 * 1024  # ~512 KiB per input block: near HBM roofline,
                                  # safe under the 16 MiB v5e scoped-VMEM default.


def _gaussian_noise_kernel(x_ref, bits_ref, o_ref, *, sigma):
    """o = x + sigma * z,  z ~ N(0,1) via Box-Muller from one uint32 per element.

    Each 32-bit word is split into two 16-bit uniforms (u1, u2).  The +0.5
    offset keeps u1 strictly positive for every bit pattern, so no NaN/Inf can
    appear even in the (discarded) padded tail of a ragged last block.
    """
    bits = bits_ref[...]                                   # uint32 (T, C)
    inv_2_16 = jnp.float32(1.0 / 65536.0)
    u1 = ((bits >> jnp.uint32(16)).astype(jnp.float32) + jnp.float32(0.5)) * inv_2_16
    u2 = ((bits & jnp.uint32(0xFFFF)).astype(jnp.float32) + jnp.float32(0.5)) * inv_2_16

    two_pi = jnp.float32(2.0 * 3.14159265358979323846)
    r = jnp.sqrt(jnp.float32(-2.0) * jnp.log(u1))
    z = r * jnp.cos(two_pi * u2)

    xf = x_ref[...].astype(jnp.float32)
    o_ref[...] = (xf + jnp.float32(sigma) * z).astype(o_ref.dtype)


def _choose_2d_layout(n):
    """Lane-dense (rows, cols) factorization of n; pad only if unavoidable."""
    for cols in (1024, 512, 256, LANE):
        if n % cols == 0:
            return n // cols, cols, 0
    pad = (-n) % LANE
    return (n + pad) // LANE, LANE, pad


def gaussian_noise_layer(x, sigma, key, training=True):
    """Pallas equivalent of GaussianNoiseLayer.forward.

    x: float array (e.g. NCHW conv activations), any shape.
    sigma: python float noise scale.
    key: jax PRNG key (thread a fresh key every training step).
    training: if False, identity (matches the PyTorch eval path).
    """
    if not training:
        return x

    orig_shape = x.shape
    orig_dtype = x.dtype
    n = x.size

    rows, cols, pad = _choose_2d_layout(n)
    flat = x.reshape(-1)
    if pad:  # fallback only for sizes not divisible by 128
        flat = jnp.pad(flat, (0, pad))
    x2d = flat.reshape(rows, cols)

    # One raw 32-bit word per (padded) element; Box-Muller happens in-kernel.
    bits = jax.random.bits(key, (rows, cols), dtype=jnp.uint32)

    elem_bytes = jnp.dtype(orig_dtype).itemsize
    bytes_per_row = cols * max(elem_bytes, 4)  # bits dominate at 4 B/elem
    tile_rows = max(1, min(rows, _TARGET_BLOCK_BYTES // bytes_per_row))
    if rows >= 8:
        tile_rows = max(8, (tile_rows // 8) * 8)  # keep sublane-aligned blocks
    grid = (pl.cdiv(rows, tile_rows),)

    spec = pl.BlockSpec((tile_rows, cols), lambda i: (i, 0))

    out2d = pl.pallas_call(
        functools.partial(_gaussian_noise_kernel, sigma=float(sigma)),
        grid=grid,
        in_specs=[spec, spec],
        out_specs=spec,
        out_shape=jax.ShapeDtypeStruct((rows, cols), orig_dtype),
        compiler_params=pltpu.CompilerParams(
            dimension_semantics=("parallel",)),
        cost_estimate=pl.CostEstimate(
            flops=10 * rows * cols,
            transcendentals=3 * rows * cols,
            bytes_accessed=rows * cols * (2 * elem_bytes + 4)),
    )(x2d, bits)

    out = out2d.reshape(-1)
    if pad:
        out = out[:n]
    return out.reshape(orig_shape)


if __name__ == "__main__":
    root = jax.random.PRNGKey(0)
    kx, knoise = jax.random.split(root)

    # Small NCHW activation, consistent with a conv feature map.
    x = jax.random.normal(kx, (2, 4, 16, 16), dtype=jnp.float32)
    sigma = 0.15

    # Training path: x + sigma * noise, Box-Muller computed inside the kernel.
    y = gaussian_noise_layer(x, sigma=sigma, key=knoise, training=True)
    y = jax.block_until_ready(y)
    assert y.shape == x.shape and y.dtype == x.dtype

    # Sanity: noise statistics should be roughly N(0, sigma^2).
    diff = y - x
    assert jnp.abs(jnp.mean(diff)) < 0.05
    assert jnp.abs(jnp.std(diff) - sigma) < 0.05

    # Eval path: identity.
    y_eval = gaussian_noise_layer(x, sigma=sigma, key=knoise, training=False)
    assert jnp.array_equal(y_eval, x)

    print("KERNEL_OK")
</pallas_src>

<mosaic_0001>
module attributes {stable_mosaic.version = 11 : i64} {
  func.func @_gaussian_noise_kernel(%arg0: i32, %arg1: memref<2x1024xf32, #tpu.memory_space<vmem>>, %arg2: memref<2x1024xi32, #tpu.memory_space<vmem>>, %arg3: memref<2x1024xf32, #tpu.memory_space<vmem>>) attributes {dimension_semantics = [#tpu.dimension_semantics<parallel>], iteration_bounds = array<i64: 1>, scalar_prefetch = 0 : i64, scratch_operands = 0 : i64, tpu.core_type = #tpu.core_type<tc>, window_params = [{transform_indices = @transform_0, window_bounds = array<i64: 2, 1024>}, {transform_indices = @transform_1, window_bounds = array<i64: 2, 1024>}, {transform_indices = @transform_2, window_bounds = array<i64: 2, 1024>}]} {
    %c0 = arith.constant 0 : index
    %c0_0 = arith.constant 0 : index
    %0 = vector.load %arg2[%c0, %c0_0] : memref<2x1024xi32, #tpu.memory_space<vmem>>, vector<2x1024xi32>
    %c16_i32 = arith.constant 16 : i32
    %1 = vector.broadcast %c16_i32 : i32 to vector<2x1024xi32>
    %2 = arith.shrui %0, %1 : vector<2x1024xi32>
    %3 = arith.uitofp %2 : vector<2x1024xi32> to vector<2x1024xf32>
    %cst = arith.constant 5.000000e-01 : f32
    %4 = vector.broadcast %cst : f32 to vector<2x1024xf32>
    %5 = arith.addf %3, %4 : vector<2x1024xf32>
    %cst_1 = arith.constant 1.52587891E-5 : f32
    %6 = vector.broadcast %cst_1 : f32 to vector<2x1024xf32>
    %7 = arith.mulf %5, %6 : vector<2x1024xf32>
    %c65535_i32 = arith.constant 65535 : i32
    %8 = vector.broadcast %c65535_i32 : i32 to vector<2x1024xi32>
    %9 = arith.andi %0, %8 : vector<2x1024xi32>
    %10 = arith.uitofp %9 : vector<2x1024xi32> to vector<2x1024xf32>
    %cst_2 = arith.constant 5.000000e-01 : f32
    %11 = vector.broadcast %cst_2 : f32 to vector<2x1024xf32>
    %12 = arith.addf %10, %11 : vector<2x1024xf32>
    %cst_3 = arith.constant 1.52587891E-5 : f32
    %13 = vector.broadcast %cst_3 : f32 to vector<2x1024xf32>
    %14 = arith.mulf %12, %13 : vector<2x1024xf32>
    %15 = math.log %7 : vector<2x1024xf32>
    %cst_4 = arith.constant -2.000000e+00 : f32
    %16 = vector.broadcast %cst_4 : f32 to vector<2x1024xf32>
    %17 = arith.mulf %16, %15 : vector<2x1024xf32>
    %18 = math.sqrt %17 : vector<2x1024xf32>
    %cst_5 = arith.constant 6.28318548 : f32
    %19 = vector.broadcast %cst_5 : f32 to vector<2x1024xf32>
    %20 = arith.mulf %19, %14 : vector<2x1024xf32>
    %21 = math.cos %20 : vector<2x1024xf32>
    %22 = arith.mulf %18, %21 : vector<2x1024xf32>
    %c0_6 = arith.constant 0 : index
    %c0_7 = arith.constant 0 : index
    %23 = vector.load %arg1[%c0_6, %c0_7] : memref<2x1024xf32, #tpu.memory_space<vmem>>, vector<2x1024xf32>
    %cst_8 = arith.constant 1.500000e-01 : f32
    %24 = vector.broadcast %cst_8 : f32 to vector<2x1024xf32>
    %25 = arith.mulf %24, %22 : vector<2x1024xf32>
    %26 = arith.addf %23, %25 : vector<2x1024xf32>
    %c0_9 = arith.constant 0 : index
    %c0_10 = arith.constant 0 : index
    %27 = vector.load %arg3[%c0_9, %c0_10] : memref<2x1024xf32, #tpu.memory_space<vmem>>, vector<2x1024xf32>
    tpu.vector_store %arg3[%c0_9, %c0_10], %26 {strides = array<i32>} : memref<2x1024xf32, #tpu.memory_space<vmem>>, vector<2x1024xf32>,
    return
  }
  func.func @transform_0(%arg0: i32) -> (i32, i32) {
    %c0_i32 = arith.constant 0 : i32
    %c0_i32_0 = arith.constant 0 : i32
    return %arg0, %c0_i32 : i32, i32
  }
  func.func @transform_1(%arg0: i32) -> (i32, i32) {
    %c0_i32 = arith.constant 0 : i32
    %c0_i32_0 = arith.constant 0 : i32
    return %arg0, %c0_i32 : i32, i32
  }
  func.func @transform_2(%arg0: i32) -> (i32, i32) {
    %c0_i32 = arith.constant 0 : i32
    %c0_i32_0 = arith.constant 0 : i32
    return %arg0, %c0_i32 : i32, i32
  }
}

</mosaic_0001>

<llo_original>
// kernel: tpu_custom_call.1
$region0: #{tpu_custom_call.1}
  #allocation0 [shape = 'u32[]', space=smem, size = 0x4, offset = 0x4, fixed_abs, tag = 'smem constant byte address 0x4 - core index']
  #allocation1 [shape = 'u32[72,128]{1,0:T(1,128)}', space=vmem, size = 0x9000, scoped, tag = 'internal scratch']
  %s0 = inlined_call_operand.hbm [shape: f32[2,1024], index: 0, kind: input, shape index: {}]
  %s1 = inlined_call_operand.hbm [shape: u32[2,1024], index: 1, kind: input, shape index: {}]
  %s2 = inlined_call_operand.hbm [shape: f32[2,1024], index: 2, kind: output, shape index: {}]
  %s3 = sld [smem:[#allocation0]]
  $region26: #{tpu_custom_call.1} parent=0
    _
  %s5 = ssub.s32 1, %s3
  %s6 = scalar_select 0, %s5, %s3
  $region1: #{tpu_custom_call.1} parent=0
    #allocation2 [shape = 'u8[8192]{0}', space=vmem, size = 0x2000, scoped, tag = 'input window, operand 0, single buffered']
    #allocation3 [shape = 's32[1]{0}', space=sflag, size = 0x4, scoped, tag = 'scoped memory for tpu_custom_call.1']
    #allocation4 [shape = 's32[1]{0}', space=sflag, size = 0x4, scoped, tag = 'scoped memory for tpu_custom_call.1']
    #allocation5 [shape = 'u8[8192]{0}', space=vmem, size = 0x2000, scoped, tag = 'input window, operand 1, single buffered']
    #allocation6 [shape = 's32[1]{0}', space=sflag, size = 0x4, scoped, tag = 'scoped memory for tpu_custom_call.1']
    #allocation7 [shape = 'u8[8192]{0}', space=vmem, size = 0x2000, scoped, tag = 'output window, operand 0, single buffered']
    %7 = vsyncpa [#allocation3], 0
    %8 = vsyncpa [#allocation6], 0
    %9 = vsyncpa [#allocation4], 0
    // Predicated region
    $region2: #{tpu_custom_call.1} parent=1 // pred_check
      _
    $region3: #{tpu_custom_call.1} parent=1 // pred_check_branch
      %11 = sbr.rel (0) target = $region5
    $region4: #{tpu_custom_call.1} parent=1 // pred_region
      %13 = vsyncadd [#allocation3], 0
      %s15 = sshll.u32 %s0, 4
      %s16 = int_to_ptr.hbm [resolvable:$true] %s15
      %s17 = sshll.u32 [#allocation2], 4
      %s18 = int_to_ptr.vmem [resolvable:$true] %s17
      %20 = dma.hbm_to_vmem [thread:$0]  %s16, 256, %s18, [#allocation3]
    $region5: #{tpu_custom_call.1} parent=1 // pred_fallthru
      _
    // Predicated region
    $region6: #{tpu_custom_call.1} parent=1 // pred_check
      _
    $region7: #{tpu_custom_call.1} parent=1 // pred_check_branch
      %22 = sbr.rel (0) target = $region9
    $region8: #{tpu_custom_call.1} parent=1 // pred_region
      %24 = vsyncadd [#allocation6], 0
      %s26 = sshll.u32 %s1, 4
      %s27 = int_to_ptr.hbm [resolvable:$true] %s26
      %s28 = sshll.u32 [#allocation5], 4
      %s29 = int_to_ptr.vmem [resolvable:$true] %s28
      %31 = dma.hbm_to_vmem [thread:$0]  %s27, 256, %s29, [#allocation6]
    $region9: #{tpu_custom_call.1} parent=1 // pred_fallthru
      _
    // Predicated region
    $region10: #{tpu_custom_call.1} parent=1 // pred_check
      _
    $region11: #{tpu_custom_call.1} parent=1 // pred_check_branch
      %33 = sbr.rel (0) target = $region13
    $region12: #{tpu_custom_call.1} parent=1 // pred_region
      %35 = dma.done [#allocation3], 256
    $region13: #{tpu_custom_call.1} parent=1 // pred_fallthru
      _
    // Predicated region
    $region14: #{tpu_custom_call.1} parent=1 // pred_check
      _
    $region15: #{tpu_custom_call.1} parent=1 // pred_check_branch
      %37 = sbr.rel (0) target = $region17
    $region16: #{tpu_custom_call.1} parent=1 // pred_region
      %39 = dma.done [#allocation6], 256
    $region17: #{tpu_custom_call.1} parent=1 // pred_fallthru
      _
    %v40 = vld [vmem:[#allocation5] sm:$0xff]
    %v41 = vld [vmem:[#allocation5 + $0x8] sm:$0xff]
    %v42 = vshrl.u32 %v40, 16
    %v43 = vshrl.u32 %v41, 16
    %v44 = vshrl.u32 %v42, 16
    %v45 = vand.u32 %v42, 65535
    %v46 = vcvt.s32.f32 %v44
    %v47 = vmul.f32 %v46, 65536.0
    %v48 = vcvt.s32.f32 %v45
    %v49 = vadd.f32 %v47, %v48
    %v50 = vshrl.u32 %v43, 16
    %v51 = vand.u32 %v43, 65535
    %v52 = vcvt.s32.f32 %v50
    %v53 = vmul.f32 %v52, 65536.0
    %v54 = vcvt.s32.f32 %v51
    %v55 = vadd.f32 %v53, %v54
    %v56 = vadd.f32 %v49, 0.5
    %v57 = vadd.f32 %v55, 0.5
    %v58 = vmul.f32 %v56, 1.5258789e-05
    %v59 = vmul.f32 %v57, 1.5258789e-05
    %v60 = vand.u32 %v40, 65535
    %v61 = vand.u32 %v41, 65535
    %v62 = vshrl.u32 %v60, 16
    %v63 = vand.u32 %v60, 65535
    %v64 = vcvt.s32.f32 %v62
    %v65 = vmul.f32 %v64, 65536.0
    %v66 = vcvt.s32.f32 %v63
    %v67 = vadd.f32 %v65, %v66
    %v68 = vshrl.u32 %v61, 16
    %v69 = vand.u32 %v61, 65535
    %v70 = vcvt.s32.f32 %v68
    %v71 = vmul.f32 %v70, 65536.0
    %v72 = vcvt.s32.f32 %v69
    %v73 = vadd.f32 %v71, %v72
    %v74 = vadd.f32 %v67, 0.5
    %v75 = vadd.f32 %v73, 0.5
    %v76 = vmul.f32 %v74, 1.5258789e-05
    %v77 = vmul.f32 %v75, 1.5258789e-05
    %v78 = vlog2.pop %v58
    %v79 = vmul.f32 %v78, 0.6931472
    %v80 = vlog2.pop %v59
    %v81 = vmul.f32 %v80, 0.6931472
    %v82 = vmul.f32 %v79, -2.0
    %v83 = vmul.f32 %v81, -2.0
    %v84 = vrsqrt.pop %v82
    %v85 = vmul.f32 %v84, %v82
    %v86 = vmul.f32 %v85, %v84
    %v87 = vmul.f32 0.5, %v86
    %v88 = vsub.f32 1.5, %v87
    %v89 = vmul.f32 %v84, %v88
    %v90 = vmul.f32 %v82, %v89
    %vm91 = vcmp.eq.f32.partialorder %v82, inf
    %v92 = vsel %vm91, %v82, %v90
    %vm93 = vcmp.eq.f32.partialorder %v82, 0.0
    %v94 = vand.u32 %v82, 2147483648
    %v95 = vsel %vm93, %v94, %v92
    %v96 = vrsqrt.pop %v83
    %v97 = vmul.f32 %v96, %v83
    %v98 = vmul.f32 %v97, %v96
    %v99 = vmul.f32 0.5, %v98
    %v100 = vsub.f32 1.5, %v99
    %v101 = vmul.f32 %v96, %v100
    %v102 = vmul.f32 %v83, %v101
    %vm103 = vcmp.eq.f32.partialorder %v83, inf
    %v104 = vsel %vm103, %v83, %v102
    %vm105 = vcmp.eq.f32.partialorder %v83, 0.0
    %v106 = vand.u32 %v83, 2147483648
    %v107 = vsel %vm105, %v106, %v104
    %v108 = vmul.f32 %v76, 6.2831855
    %v109 = vmul.f32 %v77, 6.2831855
    %v110 = vand.u32 2147483647, %v108
    %vm111 = vcmp.le.f32.partialorder %v110, 0.7853982
    %vm112 = vcmp.lt.s32.totalorder %v108, 0
    %v113 = vand.u32 %v108, 2139095040
    %v114 = vshrl.u32 %v113, 23
    %v115 = vsub.s32 %v114, 127
    %v116 = vand.u32 2147483647, %v108
    %v117 = vand.u32 %v116, 8388607
    %v118 = vor.u32 %v117, 8388608
    %v119 = vsub.s32 0, %v118
    %v120 = vadd.s32 %v115, 1
    %vm121 = vcmp.gt.s32.totalorder %v120, 0
    %v122 = vsel %vm121, %v120, 0
    %v123 = vshrl.u32 %v122, 5
    %v124 = vand.u32 %v122, 31
    %v125 = vsub.s32 32, %v124
    %v126 = vshrl.u32 683565275, %v125
    %v127 = vshll.u32 683565275, %v124
    %v128 = vshrl.u32 2475754826, %v125
    %v129 = vor.u32 %v127, %v128
    %v130 = vshll.u32 2475754826, %v124
    %v131 = vshrl.u32 2131351028, %v125
    %v132 = vor.u32 %v130, %v131
    %v133 = vshll.u32 2131351028, %v124
    %v134 = vshrl.u32 2102212464, %v125
    %v135 = vor.u32 %v133, %v134
    %v136 = vshll.u32 2102212464, %v124
    %v137 = vshrl.u32 920167782, %v125
    %v138 = vor.u32 %v136, %v137
    %v139 = vshll.u32 920167782, %v124
    %v140 = vshrl.u32 1326507024, %v125
    %v141 = vor.u32 %v139, %v140
    %vm142 = vcmp.lt.s32.totalorder %v123, 1
    %vm143 = vcmp.lt.s32.totalorder %v123, 2
    %vm144 = vcmp.lt.s32.totalorder %v123, 3
    %vm145 = vcmp.lt.s32.totalorder %v123, 4
    %v146 = vsel %vm142, %v126, %v129
    %v147 = vsel %vm145, %v135, 2102212464
    %v148 = vsel %vm144, %v132, %v147
    %v149 = vsel %vm143, %v146, %v148
    %v150 = vsel %vm142, %v129, %v132
    %v151 = vsel %vm145, %v138, 920167782
    %v152 = vsel %vm144, %v135, %v151
    %v153 = vsel %vm143, %v150, %v152
    %v154 = vsel %vm142, %v132, %v135
    %v155 = vsel %vm145, %v141, 1326507024
    %v156 = vsel %vm144, %v138, %v155
    %v157 = vsel %vm143, %v154, %v156
    %v158 = vshll.u32 %v118, 8
    %v159 = vand.u32 %v158, 65535
    %v160 = vshrl.u32 %v158, 16
    %v161 = vand.u32 %v157, 65535
    %v162 = vshrl.u32 %v157, 16
    %v163 = vmul.u32 %v159, %v161
    %v164 = vmul.u32 %v159, %v162
    %v165 = vmul.u32 %v160, %v161
    %v166 = vmul.u32 %v160, %v162
    %v167 = vshll.u32 %v164, 16
    %v168 = vshrl.u32 %v164, 16
    %v169 = vshll.u32 %v165, 16
    %v170 = vshrl.u32 %v165, 16
    %vm171 = vc.u32 %v163, %v167
    %v172 = vsel %vm171, 1, 0
    %v173 = vadd.s32 %v163, %v167
    %v174 = vadd.s32 %v166, %v172
    %vm175 = vc.u32 %v173, %v169
    %v176 = vsel %vm175, 1, 0
    %v177 = vadd.s32 %v173, %v169
    %v178 = vadd.s32 %v174, %v176
    %v179 = vadd.s32 %v178, %v168
    %v180 = vadd.s32 %v179, %v170
    %v181 = vand.u32 %v158, 65535
    %v182 = vshrl.u32 %v158, 16
    %v183 = vand.u32 %v153, 65535
    %v184 = vshrl.u32 %v153, 16
    %v185 = vmul.u32 %v181, %v183
    %v186 = vmul.u32 %v181, %v184
    %v187 = vmul.u32 %v182, %v183
    %v188 = vmul.u32 %v182, %v184
    %v189 = vshll.u32 %v186, 16
    %v190 = vshrl.u32 %v186, 16
    %v191 = vshll.u32 %v187, 16
    %v192 = vshrl.u32 %v187, 16
    %vm193 = vc.u32 %v185, %v189
    %v194 = vsel %vm193, 1, 0
    %v195 = vadd.s32 %v185, %v189
    %v196 = vadd.s32 %v188, %v194
    %vm197 = vc.u32 %v195, %v191
    %v198 = vsel %vm197, 1, 0
    %v199 = vadd.s32 %v195, %v191
    %v200 = vadd.s32 %v196, %v198
    %v201 = vadd.s32 %v200, %v190
    %v202 = vadd.s32 %v201, %v192
    %v203 = vmul.u32 %v158, %v149
    %v204 = vadd.s32 %v180, %v199
    %vm205 = vc.u32 %v180, %v199
    %v206 = vadd.s32 %v202, 1
    %v207 = vsel %vm205, %v206, %v202
    %v208 = vadd.s32 %v203, %v207
    %v209 = vadd.s32 %v208, 536870912
    %v210 = vshrl.u32 %v209, 30
    %v211 = vshll.u32 %v210, 30
    %v212 = vsub.s32 %v208, %v211
    %vm213 = vcmp.lt.s32.totalorder %v212, 0
    %v214 = vsub.s32 0, %v212
    %v215 = vsel %vm213, %v214, %v212
    %v216 = vclz %v215
    %v217 = vsub.s32 %v216, 2
    %vm218 = vcmp.gt.s32.totalorder 0, %v217
    %v219 = vsel %vm218, 0, %v217
    %v220 = vsub.s32 32, %v219
    %v221 = vshll.u32 %v212, %v219
    %v222 = vshrl.u32 %v204, %v220
    %v223 = vor.u32 %v221, %v222
    %v224 = vsub.s32 4294967266, %v219
    %v225 = vadd.s32 %v224, 127
    %v226 = vshll.u32 %v225, 23
    %v227 = vor.u32 4788187, %v226
    %v228 = vand.u32 2147483647, %v227
    %v230 = vcvt.s32.f32 %v223
    %v231 = vmul.f32 %v230, %v228
    %v232 = vxor.u32 %v231, 2147483648
    %v233 = vsel %vm112, %v232, %v231
    %v234 = vsub.s32 4, %v210
    %v235 = vsel %vm112, %v234, %v210
    %v236 = vsel %vm111, %v108, %v233
    %v237 = vsel %vm111, 0, %v235
    %v238 = vmul.f32 %v236, %v236
    %v239 = vmul.f32 %v238, -0.001358992
    %v240 = vadd.f32 %v239, 0.041655596
    %v241 = vmul.f32 %v238, %v240
    %v242 = vadd.f32 %v241, -0.4999988
    %v243 = vmul.f32 %v238, %v242
    %v244 = vadd.f32 1.0, %v243
    %v245 = vmul.f32 %v236, %v236
    %v246 = vmul.f32 %v245, -0.00019511016
    %v247 = vadd.f32 %v246, 0.008332121
    %v248 = vmul.f32 %v245, %v247
    %v249 = vadd.f32 %v248, -0.16666654
    %v250 = vmul.f32 %v245, %v249
    %v251 = vadd.f32 %v250, 1.0
    %v252 = vmul.f32 %v251, %v236
    %vm253 = vweird.f32 %v108
    %v254 = vand.u32 %v237, 3
    %vm255 = vcmp.lt.s32.totalorder %v254, 2
    %vm256 = vcmp.eq.s32.totalorder %v254, 0
    %v257 = vxor.u32 %v252, 2147483648
    %v258 = vsel %vm256, %v244, %v257
    %vm259 = vcmp.eq.s32.totalorder %v254, 2
    %v260 = vxor.u32 %v244, 2147483648
    %v261 = vsel %vm259, %v260, %v252
    %v262 = vsel %vm255, %v258, %v261
    %v263 = vsel %vm253, nan, %v262
    %v264 = vand.u32 2147483647, %v109
    %vm265 = vcmp.le.f32.partialorder %v264, 0.7853982
    %vm266 = vcmp.lt.s32.totalorder %v109, 0
    %v267 = vand.u32 %v109, 2139095040
    %v268 = vshrl.u32 %v267, 23
    %v269 = vsub.s32 %v268, 127
    %v270 = vand.u32 2147483647, %v109
    %v271 = vand.u32 %v270, 8388607
    %v272 = vor.u32 %v271, 8388608
    %v273 = vsub.s32 0, %v272
    %v274 = vadd.s32 %v269, 1
    %vm275 = vcmp.gt.s32.totalorder %v274, 0
    %v276 = vsel %vm275, %v274, 0
    %v277 = vshrl.u32 %v276, 5
    %v278 = vand.u32 %v276, 31
    %v279 = vsub.s32 32, %v278
    %v280 = vshrl.u32 683565275, %v279
    %v281 = vshll.u32 683565275, %v278
    %v282 = vshrl.u32 2475754826, %v279
    %v283 = vor.u32 %v281, %v282
    %v284 = vshll.u32 2475754826, %v278
    %v285 = vshrl.u32 2131351028, %v279
    %v286 = vor.u32 %v284, %v285
    %v287 = vshll.u32 2131351028, %v278
    %v288 = vshrl.u32 2102212464, %v279
    %v289 = vor.u32 %v287, %v288
    %v290 = vshll.u32 2102212464, %v278
    %v291 = vshrl.u32 920167782, %v279
    %v292 = vor.u32 %v290, %v291
    %v293 = vshll.u32 920167782, %v278
    %v294 = vshrl.u32 1326507024, %v279
    %v295 = vor.u32 %v293, %v294
    %vm296 = vcmp.lt.s32.totalorder %v277, 1
    %vm297 = vcmp.lt.s32.totalorder %v277, 2
    %vm298 = vcmp.lt.s32.totalorder %v277, 3
    %vm299 = vcmp.lt.s32.totalorder %v277, 4
    %v300 = vsel %vm296, %v280, %v283
    %v301 = vsel %vm299, %v289, 2102212464
    %v302 = vsel %vm298, %v286, %v301
    %v303 = vsel %vm297, %v300, %v302
    %v304 = vsel %vm296, %v283, %v286
    %v305 = vsel %vm299, %v292, 920167782
    %v306 = vsel %vm298, %v289, %v305
    %v307 = vsel %vm297, %v304, %v306
    %v308 = vsel %vm296, %v286, %v289
    %v309 = vsel %vm299, %v295, 1326507024
    %v310 = vsel %vm298, %v292, %v309
    %v311 = vsel %vm297, %v308, %v310
    %v312 = vshll.u32 %v272, 8
    %v313 = vand.u32 %v312, 65535
    %v314 = vshrl.u32 %v312, 16
    %v315 = vand.u32 %v311, 65535
    %v316 = vshrl.u32 %v311, 16
    %v317 = vmul.u32 %v313, %v315
    %v318 = vmul.u32 %v313, %v316
    %v319 = vmul.u32 %v314, %v315
    %v320 = vmul.u32 %v314, %v316
    %v321 = vshll.u32 %v318, 16
    %v322 = vshrl.u32 %v318, 16
    %v323 = vshll.u32 %v319, 16
    %v324 = vshrl.u32 %v319, 16
    %vm325 = vc.u32 %v317, %v321
    %v326 = vsel %vm325, 1, 0
    %v327 = vadd.s32 %v317, %v321
    %v328 = vadd.s32 %v320, %v326
    %vm329 = vc.u32 %v327, %v323
    %v330 = vsel %vm329, 1, 0
    %v331 = vadd.s32 %v327, %v323
    %v332 = vadd.s32 %v328, %v330
    %v333 = vadd.s32 %v332, %v322
    %v334 = vadd.s32 %v333, %v324
    %v335 = vand.u32 %v312, 65535
    %v336 = vshrl.u32 %v312, 16
    %v337 = vand.u32 %v307, 65535
    %v338 = vshrl.u32 %v307, 16
    %v339 = vmul.u32 %v335, %v337
    %v340 = vmul.u32 %v335, %v338
    %v341 = vmul.u32 %v336, %v337
    %v342 = vmul.u32 %v336, %v338
    %v343 = vshll.u32 %v340, 16
    %v344 = vshrl.u32 %v340, 16
    %v345 = vshll.u32 %v341, 16
    %v346 = vshrl.u32 %v341, 16
    %vm347 = vc.u32 %v339, %v343
    %v348 = vsel %vm347, 1, 0
    %v349 = vadd.s32 %v339, %v343
    %v350 = vadd.s32 %v342, %v348
    %vm351 = vc.u32 %v349, %v345
    %v352 = vsel %vm351, 1, 0
    %v353 = vadd.s32 %v349, %v345
    %v354 = vadd.s32 %v350, %v352
    %v355 = vadd.s32 %v354, %v344
    %v356 = vadd.s32 %v355, %v346
    %v357 = vmul.u32 %v312, %v303
    %v358 = vadd.s32 %v334, %v353
    %vm359 = vc.u32 %v334, %v353
    %v360 = vadd.s32 %v356, 1
    %v361 = vsel %vm359, %v360, %v356
    %v362 = vadd.s32 %v357, %v361
    %v363 = vadd.s32 %v362, 536870912
    %v364 = vshrl.u32 %v363, 30
    %v365 = vshll.u32 %v364, 30
    %v366 = vsub.s32 %v362, %v365
    %vm367 = vcmp.lt.s32.totalorder %v366, 0
    %v368 = vsub.s32 0, %v366
    %v369 = vsel %vm367, %v368, %v366
    %v370 = vclz %v369
    %v371 = vsub.s32 %v370, 2
    %vm372 = vcmp.gt.s32.totalorder 0, %v371
    %v373 = vsel %vm372, 0, %v371
    %v374 = vsub.s32 32, %v373
    %v375 = vshll.u32 %v366, %v373
    %v376 = vshrl.u32 %v358, %v374
    %v377 = vor.u32 %v375, %v376
    %v378 = vsub.s32 4294967266, %v373
    %v379 = vadd.s32 %v378, 127
    %v380 = vshll.u32 %v379, 23
    %v381 = vor.u32 4788187, %v380
    %v382 = vand.u32 2147483647, %v381
    %v384 = vcvt.s32.f32 %v377
    %v385 = vmul.f32 %v384, %v382
    %v386 = vxor.u32 %v385, 2147483648
    %v387 = vsel %vm266, %v386, %v385
    %v388 = vsub.s32 4, %v364
    %v389 = vsel %vm266, %v388, %v364
    %v390 = vsel %vm265, %v109, %v387
    %v391 = vsel %vm265, 0, %v389
    %v392 = vmul.f32 %v390, %v390
    %v393 = vmul.f32 %v392, -0.001358992
    %v394 = vadd.f32 %v393, 0.041655596
    %v395 = vmul.f32 %v392, %v394
    %v396 = vadd.f32 %v395, -0.4999988
    %v397 = vmul.f32 %v392, %v396
    %v398 = vadd.f32 1.0, %v397
    %v399 = vmul.f32 %v390, %v390
    %v400 = vmul.f32 %v399, -0.00019511016
    %v401 = vadd.f32 %v400, 0.008332121
    %v402 = vmul.f32 %v399, %v401
    %v403 = vadd.f32 %v402, -0.16666654
    %v404 = vmul.f32 %v399, %v403
    %v405 = vadd.f32 %v404, 1.0
    %v406 = vmul.f32 %v405, %v390
    %vm407 = vweird.f32 %v109
    %v408 = vand.u32 %v391, 3
    %vm409 = vcmp.lt.s32.totalorder %v408, 2
    %vm410 = vcmp.eq.s32.totalorder %v408, 0
    %v411 = vxor.u32 %v406, 2147483648
    %v412 = vsel %vm410, %v398, %v411
    %vm413 = vcmp.eq.s32.totalorder %v408, 2
    %v414 = vxor.u32 %v398, 2147483648
    %v415 = vsel %vm413, %v414, %v406
    %v416 = vsel %vm409, %v412, %v415
    %v417 = vsel %vm407, nan, %v416
    %v418 = vmul.f32 %v95, %v263
    %v419 = vmul.f32 %v107, %v417
    %v420 = vld [vmem:[#allocation2] sm:$0xff]
    %v421 = vld [vmem:[#allocation2 + $0x8] sm:$0xff]
    %v422 = vmul.f32 %v418, 0.15
    %v423 = vmul.f32 %v419, 0.15
    %v424 = vadd.f32 %v420, %v422
    %v425 = vadd.f32 %v421, %v423
    %426 = vst [vmem:[#allocation7] sm:$0xff] %v424
    %427 = vst [vmem:[#allocation7 + $0x8] sm:$0xff] %v425
    // Predicated region
    $region18: #{tpu_custom_call.1} parent=1 // pred_check
      _
    $region19: #{tpu_custom_call.1} parent=1 // pred_check_branch
      %429 = sbr.rel (0) target = $region21
    $region20: #{tpu_custom_call.1} parent=1 // pred_region
      %431 = vsyncadd [#allocation4], 0
      %s433 = sshll.u32 [#allocation7], 4
      %s434 = int_to_ptr.vmem [resolvable:$true] %s433
      %s435 = sshll.u32 %s2, 4
      %s436 = int_to_ptr.hbm [resolvable:$true] %s435
      %438 = dma.vmem_to_hbm [thread:$0]  %s434, 256, %s436, [#allocation4]
    $region21: #{tpu_custom_call.1} parent=1 // pred_fallthru
      _
    // Predicated region
    $region22: #{tpu_custom_call.1} parent=1 // pred_check
      _
    $region23: #{tpu_custom_call.1} parent=1 // pred_check_branch
      %440 = sbr.rel (0) target = $region25
    $region24: #{tpu_custom_call.1} parent=1 // pred_region
      %442 = dma.done [#allocation4], 256
    $region25: #{tpu_custom_call.1} parent=1 // pred_fallthru
      _
    %443 = vsyncpa [#allocation3], 1
    %444 = vsyncpa [#allocation6], 1
    %445 = vsyncpa [#allocation4], 1

</llo_original>
